<compile_context>
chip_gen: v5e
topology: v5e:2x2
jax: 0.10.0
libtpu: 0.0.40
codegen_flags: <defaults>
</compile_context>

<pallas_src>
import numpy as np

import jax
import jax.numpy as jnp
from jax.experimental import pallas as pl
from jax.experimental.pallas import tpu as pltpu


def _round_up(x, m):
    return ((x + m - 1) // m) * m


_NEG_BIG = -1e30                       # padded columns can never win, can't NaN
_W_RESIDENT_BYTES = 8 * 1024 * 1024    # keep W resident in VMEM below this size
_MAX_TILE_B = 512
_MAX_TILE_K = 2048
_VMEM_CAP = 48 * 1024 * 1024           # safe on v7x (64 MiB/TC), plenty for v5e/v6e


# ---------------------------------------------------------------------------
# Kernels
# ---------------------------------------------------------------------------
def _epilogue(logits, cmap, out_ref):
    """First-occurrence argmax over compact columns + class-map lookup."""
    kp = logits.shape[-1]
    iota = jax.lax.broadcasted_iota(jnp.int32, logits.shape, 1)
    max_val = jnp.max(logits, axis=-1, keepdims=True)            # (TILE_B, 1)
    cand = jnp.where(logits == max_val, iota, kp)                # ties -> smallest idx
    argmax = jnp.min(cand, axis=-1, keepdims=True)               # (TILE_B, 1)
    classes = jnp.sum(jnp.where(iota == argmax, cmap, 0), axis=-1)   # (TILE_B,)
    out_ref[...] = classes.astype(jnp.int32).reshape(out_ref.shape)


def _kernel_single(x_ref, w_ref, b_ref, cmap_ref, out_ref):
    # Whole feature dim in one tile: no k axis, no accumulator carry.
    x = x_ref[...].astype(w_ref.dtype)                           # in-kernel f32->bf16
    logits = jnp.dot(x, w_ref[...], preferred_element_type=jnp.float32) + b_ref[...]
    _epilogue(logits, cmap_ref[...], out_ref)


def _make_kernel_resident(tile_k):
    # W fully resident in VMEM; slice the current K tile in-kernel.
    def kernel(x_ref, w_ref, b_ref, cmap_ref, out_ref, acc_ref):
        k = pl.program_id(1)

        @pl.when(k == 0)
        def _():
            acc_ref[...] = jnp.zeros_like(acc_ref)

        off = pl.multiple_of(k * tile_k, 128)
        w_tile = w_ref[pl.ds(off, tile_k), :]
        acc_ref[...] += jnp.dot(x_ref[...].astype(w_ref.dtype), w_tile,
                                preferred_element_type=jnp.float32)

        @pl.when(k == pl.num_programs(1) - 1)
        def _():
            _epilogue(acc_ref[...] + b_ref[...], cmap_ref[...], out_ref)

    return kernel


def _kernel_streamed(x_ref, w_ref, b_ref, cmap_ref, out_ref, acc_ref):
    # Fallback for very large D: W streamed per K tile.
    k = pl.program_id(1)

    @pl.when(k == 0)
    def _():
        acc_ref[...] = jnp.zeros_like(acc_ref)

    acc_ref[...] += jnp.dot(x_ref[...].astype(w_ref.dtype), w_ref[...],
                            preferred_element_type=jnp.float32)

    @pl.when(k == pl.num_programs(1) - 1)
    def _():
        _epilogue(acc_ref[...] + b_ref[...], cmap_ref[...], out_ref)


# ---------------------------------------------------------------------------
# Host-side preparation (hoist out of the per-call path)
# ---------------------------------------------------------------------------
def prepare_partial_classes_tables(w, b, used_indices, index_to_class,
                                   *, matmul_dtype=jnp.bfloat16):
    """One-time compaction of W/b and the compact-index -> coarse-class table.

    Precompute once per (W, used_indices) configuration and reuse across calls.
    `matmul_dtype=jnp.float32` is the accuracy escape hatch (no bf16 rounding).
    """
    used = np.unique(np.asarray(used_indices, dtype=np.int64))
    if used.size == 0:
        # TODO(synk): PyTorch would argmax an all -inf row and then KeyError;
        # there is no sensible class id to return, so fail fast instead.
        raise ValueError("used_indices must be non-empty")
    k_used = int(used.size)
    k_pad = _round_up(k_used, 128)

    used_j = jnp.asarray(used, dtype=jnp.int32)
    w_c = jnp.take(w, used_j, axis=1).astype(matmul_dtype)            # (D, k_used)
    w_c = jnp.pad(w_c, ((0, 0), (0, k_pad - k_used)))                 # (D, k_pad)
    b_c = jnp.pad(jnp.take(b, used_j, axis=0).astype(jnp.float32),
                  (0, k_pad - k_used),
                  constant_values=_NEG_BIG).reshape(1, k_pad)          # (1, k_pad)

    cmap_np = np.full((1, k_pad), -1, dtype=np.int32)
    for j, idx in enumerate(used):
        cmap_np[0, j] = int(index_to_class[int(idx)])
    return w_c, b_c, jnp.asarray(cmap_np)


# ---------------------------------------------------------------------------
# pallas_call wrapper
# ---------------------------------------------------------------------------
def partial_classes_apply(x_nchw, w_c, b_c, cmap,
                          *, max_tile_b=_MAX_TILE_B, max_tile_k=_MAX_TILE_K):
    """x_nchw: [B, C, H, W] f32. Returns int32 [B] coarse class ids."""
    B = int(x_nchw.shape[0])
    D = int(np.prod(x_nchw.shape[1:]))
    assert int(w_c.shape[0]) == D, "feature dim mismatch between x and W"
    k_pad = int(w_c.shape[1])

    # ---- tiling: nb >= 2 when B allows (v7x megacore), minimal batch padding ----
    TILE_B = min(max_tile_b, _round_up(max(1, (B + 1) // 2), 8))
    TILE_K = min(max_tile_k, _round_up(D, 128))
    B_pad = _round_up(B, TILE_B)
    D_pad = _round_up(D, TILE_K)
    nb = B_pad // TILE_B
    nk = D_pad // TILE_K

    # ---- x stays f32; only minimal zero-padding when shapes are ragged ----
    x_flat = x_nchw.reshape(B, D)
    if B_pad != B or D_pad != D:
        x_flat = jnp.pad(x_flat, ((0, B_pad - B), (0, D_pad - D)))
    w_p = w_c if D_pad == D else jnp.pad(w_c, ((0, D_pad - D), (0, 0)))

    x_itemsize = jnp.dtype(x_flat.dtype).itemsize
    w_itemsize = jnp.dtype(w_p.dtype).itemsize
    w_resident = D_pad * k_pad * w_itemsize <= _W_RESIDENT_BYTES

    if nk == 1:
        kernel = _kernel_single
        grid = (nb,)
        in_specs = [
            pl.BlockSpec((TILE_B, D_pad), lambda i: (i, 0)),
            pl.BlockSpec((D_pad, k_pad), lambda i: (0, 0)),      # W resident
            pl.BlockSpec((1, k_pad), lambda i: (0, 0)),          # bias resident
            pl.BlockSpec((1, k_pad), lambda i: (0, 0)),          # cmap resident
        ]
        out_spec = pl.BlockSpec((1, 1, TILE_B), lambda i: (i, 0, 0))
        scratch = []
        dims = ("parallel",)
        w_block_bytes = D_pad * k_pad * w_itemsize
        x_block_bytes = TILE_B * D_pad * x_itemsize
        acc_bytes = 0
    elif w_resident:
        kernel = _make_kernel_resident(TILE_K)
        grid = (nb, nk)
        in_specs = [
            pl.BlockSpec((TILE_B, TILE_K), lambda i, k: (i, k)),
            pl.BlockSpec((D_pad, k_pad), lambda i, k: (0, 0)),   # W resident, sliced in-kernel
            pl.BlockSpec((1, k_pad), lambda i, k: (0, 0)),
            pl.BlockSpec((1, k_pad), lambda i, k: (0, 0)),
        ]
        out_spec = pl.BlockSpec((1, 1, TILE_B), lambda i, k: (i, 0, 0))
        scratch = [pltpu.VMEM((TILE_B, k_pad), jnp.float32)]
        dims = ("parallel", "arbitrary")
        w_block_bytes = D_pad * k_pad * w_itemsize
        x_block_bytes = TILE_B * TILE_K * x_itemsize
        acc_bytes = TILE_B * k_pad * 4
    else:
        kernel = _kernel_streamed
        grid = (nb, nk)
        in_specs = [
            pl.BlockSpec((TILE_B, TILE_K), lambda i, k: (i, k)),
            pl.BlockSpec((TILE_K, k_pad), lambda i, k: (k, 0)),  # W streamed per k
            pl.BlockSpec((1, k_pad), lambda i, k: (0, 0)),
            pl.BlockSpec((1, k_pad), lambda i, k: (0, 0)),
        ]
        out_spec = pl.BlockSpec((1, 1, TILE_B), lambda i, k: (i, 0, 0))
        scratch = [pltpu.VMEM((TILE_B, k_pad), jnp.float32)]
        dims = ("parallel", "arbitrary")
        w_block_bytes = TILE_K * k_pad * w_itemsize
        x_block_bytes = TILE_B * TILE_K * x_itemsize
        acc_bytes = TILE_B * k_pad * 4

    est = 2 * (x_block_bytes + w_block_bytes + 2 * k_pad * 4 + TILE_B * 4) + acc_bytes
    vmem_limit = int(min(_VMEM_CAP, max(32 * 1024 * 1024, 2 * est)))

    out = pl.pallas_call(
        kernel,
        out_shape=jax.ShapeDtypeStruct((nb, 1, TILE_B), jnp.int32),
        grid_spec=pltpu.PrefetchScalarGridSpec(
            num_scalar_prefetch=0,
            grid=grid,
            in_specs=in_specs,
            out_specs=out_spec,
            scratch_shapes=scratch,
        ),
        compiler_params=pltpu.CompilerParams(
            dimension_semantics=dims,
            vmem_limit_bytes=vmem_limit,
        ),
    )(x_flat, w_p, b_c, cmap)

    # TODO(synk): PyTorch returns an int64 LongTensor; int32 kept (JAX x64 off).
    return out.reshape(-1)[:B]


def partial_classes_classifier(x_nchw, w, b, used_indices, index_to_class,
                               *, matmul_dtype=jnp.bfloat16):
    """Convenience wrapper: prepare tables (one-time glue) + apply the kernel."""
    w_c, b_c, cmap = prepare_partial_classes_tables(
        w, b, used_indices, index_to_class, matmul_dtype=matmul_dtype)
    return partial_classes_apply(x_nchw, w_c, b_c, cmap)


if __name__ == "__main__":
    key = jax.random.PRNGKey(0)
    kx, kw, kb = jax.random.split(key, 3)

    # Small shapes consistent with an NCHW image classifier.
    B, C, H, W = 2, 4, 16, 16
    D = C * H * W
    NUM_CLASSES = 16

    x = jax.random.normal(kx, (B, C, H, W), dtype=jnp.float32)
    w = jax.random.normal(kw, (D, NUM_CLASSES), dtype=jnp.float32) * 0.05
    b = jax.random.normal(kb, (NUM_CLASSES,), dtype=jnp.float32) * 0.05

    # sub_classes_indices = {coarse_class: [fine logit indices]}
    sub_classes_indices = {0: [1, 3, 4], 1: [7, 9], 2: [12, 13, 15]}
    index_to_class = {}
    used_indices = []
    for class_index, indices in sub_classes_indices.items():
        index_to_class.update({i: class_index for i in indices})
        used_indices.extend(indices)

    # Tables prepared once (hoisted glue), kernel applied to x.
    w_c, b_c, cmap = prepare_partial_classes_tables(
        w, b, used_indices, index_to_class)
    out = partial_classes_apply(x, w_c, b_c, cmap)
    out = jax.block_until_ready(out)

    # Pure-JAX reference, mirroring the kernel's bf16 matmul operands
    # (epilogue in f32, full-N masked argmax like the PyTorch module).
    x_r = x.reshape(B, D).astype(jnp.bfloat16).astype(jnp.float32)
    w_r = w.astype(jnp.bfloat16).astype(jnp.float32)
    logits_ref = x_r @ w_r + b
    mask = np.zeros((NUM_CLASSES,), dtype=bool)
    mask[np.asarray(used_indices)] = True
    masked_ref = jnp.where(jnp.asarray(mask), logits_ref, -jnp.inf)
    argmax_ref = np.asarray(jnp.argmax(masked_ref, axis=-1))
    expected = np.asarray([index_to_class[int(i)] for i in argmax_ref],
                          dtype=np.int32)
    np.testing.assert_array_equal(np.asarray(out), expected)

    print("KERNEL_OK")
</pallas_src>

<mosaic_0001>
module attributes {stable_mosaic.version = 11 : i64} {
  func.func @_kernel_single(%arg0: i32, %arg1: memref<8x1024xf32, #tpu.memory_space<vmem>>, %arg2: memref<1024x128xbf16, #tpu.memory_space<vmem>>, %arg3: memref<1x128xf32, #tpu.memory_space<vmem>>, %arg4: memref<1x128xi32, #tpu.memory_space<vmem>>, %arg5: memref<1x1x8xi32, #tpu.memory_space<vmem>>) attributes {dimension_semantics = [#tpu.dimension_semantics<parallel>], iteration_bounds = array<i64: 1>, scalar_prefetch = 0 : i64, scratch_operands = 0 : i64, tpu.core_type = #tpu.core_type<tc>, window_params = [{transform_indices = @transform_0, window_bounds = array<i64: 8, 1024>}, {pipeline_mode = #tpu.pipeline_mode<synchronous>, transform_indices = @transform_1, window_bounds = array<i64: 1024, 128>}, {pipeline_mode = #tpu.pipeline_mode<synchronous>, transform_indices = @transform_2, window_bounds = array<i64: 1, 128>}, {pipeline_mode = #tpu.pipeline_mode<synchronous>, transform_indices = @transform_3, window_bounds = array<i64: 1, 128>}, {transform_indices = @transform_4, window_bounds = array<i64: 1, 1, 8>}]} {
    %c0 = arith.constant 0 : index
    %c0_0 = arith.constant 0 : index
    %0 = vector.load %arg1[%c0, %c0_0] : memref<8x1024xf32, #tpu.memory_space<vmem>>, vector<8x1024xf32>
    %1 = arith.truncf %0 : vector<8x1024xf32> to vector<8x1024xbf16>
    %c0_1 = arith.constant 0 : index
    %c0_2 = arith.constant 0 : index
    %2 = vector.load %arg2[%c0_1, %c0_2] : memref<1024x128xbf16, #tpu.memory_space<vmem>>, vector<1024x128xbf16>
    %cst = arith.constant dense<0.000000e+00> : vector<8x128xf32>
    %3 = tpu.matmul %1, %2, %cst {dimension_numbers = #tpu.dot_dimension_numbers<[1], [0], [0], [1], [0, 0, 1, 1], [], []>} : vector<8x1024xbf16>, vector<1024x128xbf16>, vector<8x128xf32> -> vector<8x128xf32>
    %c0_3 = arith.constant 0 : index
    %c0_4 = arith.constant 0 : index
    %4 = vector.load %arg3[%c0_3, %c0_4] : memref<1x128xf32, #tpu.memory_space<vmem>>, vector<1x128xf32>
    %5 = vector.broadcast %4 : vector<1x128xf32> to vector<8x128xf32>
    %6 = arith.addf %3, %5 : vector<8x128xf32>
    %c0_5 = arith.constant 0 : index
    %c0_6 = arith.constant 0 : index
    %7 = vector.load %arg4[%c0_5, %c0_6] : memref<1x128xi32, #tpu.memory_space<vmem>>, vector<1x128xi32>
    %8 = tpu.iota {dimensions = array<i32: 1>} : vector<8x128xi32>
    %cst_7 = arith.constant dense<0xFF800000> : vector<8xf32>
    %9 = vector.multi_reduction <maximumf>, %6, %cst_7 [1] : vector<8x128xf32> to vector<8xf32>
    %10 = vector.shape_cast %9 : vector<8xf32> to vector<8x1xf32>
    %11 = vector.broadcast %10 : vector<8x1xf32> to vector<8x128xf32>
    %12 = arith.cmpf oeq, %6, %11 : vector<8x128xf32>
    %c128_i32 = arith.constant 128 : i32
    %13 = vector.broadcast %c128_i32 : i32 to vector<8x128xi32>
    %14 = arith.select %12, %8, %13 : vector<8x128xi1>, vector<8x128xi32>
    %cst_8 = arith.constant dense<2147483647> : vector<8xi32>
    %15 = vector.multi_reduction <minsi>, %14, %cst_8 [1] : vector<8x128xi32> to vector<8xi32>
    %16 = vector.shape_cast %15 : vector<8xi32> to vector<8x1xi32>
    %17 = vector.broadcast %16 : vector<8x1xi32> to vector<8x128xi32>
    %18 = arith.cmpi eq, %8, %17 : vector<8x128xi32>
    %c0_i32 = arith.constant 0 : i32
    %19 = vector.shape_cast %7 : vector<1x128xi32> to vector<1x128xi32>
    %20 = vector.broadcast %19 : vector<1x128xi32> to vector<8x128xi32>
    %21 = vector.broadcast %c0_i32 : i32 to vector<8x128xi32>
    %22 = arith.select %18, %20, %21 : vector<8x128xi1>, vector<8x128xi32>
    %cst_9 = arith.constant dense<0> : vector<8xi32>
    %23 = vector.multi_reduction <add>, %22, %cst_9 [1] : vector<8x128xi32> to vector<8xi32>
    %24 = vector.shape_cast %23 : vector<8xi32> to vector<1x1x8xi32>
    %c0_10 = arith.constant 0 : index
    %c0_11 = arith.constant 0 : index
    %c0_12 = arith.constant 0 : index
    %25 = vector.load %arg5[%c0_10, %c0_11, %c0_12] : memref<1x1x8xi32, #tpu.memory_space<vmem>>, vector<1x1x8xi32>
    tpu.vector_store %arg5[%c0_10, %c0_11, %c0_12], %24 {strides = array<i32>} : memref<1x1x8xi32, #tpu.memory_space<vmem>>, vector<1x1x8xi32>,
    return
  }
  func.func @transform_0(%arg0: i32) -> (i32, i32) {
    %c0_i32 = arith.constant 0 : i32
    %c0_i32_0 = arith.constant 0 : i32
    return %arg0, %c0_i32 : i32, i32
  }
  func.func @transform_1(%arg0: i32) -> (i32, i32) {
    %c0_i32 = arith.constant 0 : i32
    %c0_i32_0 = arith.constant 0 : i32
    %c0_i32_1 = arith.constant 0 : i32
    return %c0_i32, %c0_i32_0 : i32, i32
  }
  func.func @transform_2(%arg0: i32) -> (i32, i32) {
    %c0_i32 = arith.constant 0 : i32
    %c0_i32_0 = arith.constant 0 : i32
    %c0_i32_1 = arith.constant 0 : i32
    return %c0_i32, %c0_i32_0 : i32, i32
  }
  func.func @transform_3(%arg0: i32) -> (i32, i32) {
    %c0_i32 = arith.constant 0 : i32
    %c0_i32_0 = arith.constant 0 : i32
    %c0_i32_1 = arith.constant 0 : i32
    return %c0_i32, %c0_i32_0 : i32, i32
  }
  func.func @transform_4(%arg0: i32) -> (i32, i32, i32) {
    %c0_i32 = arith.constant 0 : i32
    %c0_i32_0 = arith.constant 0 : i32
    %c0_i32_1 = arith.constant 0 : i32
    return %arg0, %c0_i32, %c0_i32_0 : i32, i32, i32
  }
}

</mosaic_0001>

<llo_original>
// kernel: tpu_custom_call.1
$region0: #{tpu_custom_call.1}
  #allocation0 [shape = 'u32[]', space=smem, size = 0x4, offset = 0x4, fixed_abs, tag = 'smem constant byte address 0x4 - core index']
  #allocation1 [shape = 'u32[72,128]{1,0:T(1,128)}', space=vmem, size = 0x9000, scoped, tag = 'internal scratch']
  %s0 = inlined_call_operand.hbm [shape: f32[8,1024], index: 0, kind: input, shape index: {}]
  %s1 = inlined_call_operand.hbm [shape: bf16[1024,128], index: 1, kind: input, shape index: {}]
  %s2 = inlined_call_operand.vmem [shape: f32[1,128], index: 2, kind: input, shape index: {}]
  %s3 = inlined_call_operand.vmem [shape: s32[1,128], index: 3, kind: input, shape index: {}]
  %s4 = inlined_call_operand.hbm [shape: s32[1,1,8], index: 4, kind: output, shape index: {}]
  %s5 = sld [smem:[#allocation0]]
  $region34: #{tpu_custom_call.1} parent=0
    _
  %s7 = ssub.s32 1, %s5
  %s8 = scalar_select 0, %s7, %s5
  $region1: #{tpu_custom_call.1} parent=0
    #allocation2 [shape = 'u8[32768]{0}', space=vmem, size = 0x8000, scoped, tag = 'input window, operand 0, single buffered']
    #allocation3 [shape = 's32[1]{0}', space=sflag, size = 0x4, scoped, tag = 'scoped memory for tpu_custom_call.1']
    #allocation4 [shape = 's32[1]{0}', space=sflag, size = 0x4, scoped, tag = 'scoped memory for tpu_custom_call.1']
    #allocation5 [shape = 'u8[262144]{0}', space=vmem, size = 0x40000, scoped, tag = 'input window, operand 1, single buffered']
    #allocation6 [shape = 's32[1]{0}', space=sflag, size = 0x4, scoped, tag = 'scoped memory for tpu_custom_call.1']
    #allocation7 [shape = 'u8[512]{0}', space=vmem, size = 0x400, scoped, tag = 'output window, operand 0, single buffered']
    %9 = vsyncpa [#allocation3], 0
    %10 = vsyncpa [#allocation6], 0
    %11 = vsyncpa [#allocation4], 0
    // Predicated region
    $region2: #{tpu_custom_call.1} parent=1 // pred_check
      _
    $region3: #{tpu_custom_call.1} parent=1 // pred_check_branch
      %13 = sbr.rel (0) target = $region5
    $region4: #{tpu_custom_call.1} parent=1 // pred_region
      %15 = vsyncadd [#allocation3], 0
      %s17 = sshll.u32 %s0, 4
      %s18 = int_to_ptr.hbm [resolvable:$true] %s17
      %s19 = sshll.u32 [#allocation2], 4
      %s20 = int_to_ptr.vmem [resolvable:$true] %s19
      %22 = dma.hbm_to_vmem [thread:$0]  %s18, 1024, %s20, [#allocation3]
    $region5: #{tpu_custom_call.1} parent=1 // pred_fallthru
      _
    // Predicated region
    $region6: #{tpu_custom_call.1} parent=1 // pred_check
      _
    $region7: #{tpu_custom_call.1} parent=1 // pred_check_branch
      %24 = sbr.rel (0) target = $region9
    $region8: #{tpu_custom_call.1} parent=1 // pred_region
      %26 = vsyncadd [#allocation6], 0
      %s27 = sshll.u32 %s1, 4
      %s28 = int_to_ptr.hbm [resolvable:$true] %s27
      %s29 = sshll.u32 [#allocation5], 4
      %s30 = int_to_ptr.vmem [resolvable:$true] %s29
      %35 = dma.hbm_to_vmem [thread:$0]  %s28, 8192, %s30, [#allocation6], 64, 64, 4
    $region9: #{tpu_custom_call.1} parent=1 // pred_fallthru
      _
    // Predicated region
    $region10: #{tpu_custom_call.1} parent=1 // pred_check
      _
    $region11: #{tpu_custom_call.1} parent=1 // pred_check_branch
      %37 = sbr.rel (0) target = $region13
    $region12: #{tpu_custom_call.1} parent=1 // pred_region
      _
    $region13: #{tpu_custom_call.1} parent=1 // pred_fallthru
      _
    // Predicated region
    $region14: #{tpu_custom_call.1} parent=1 // pred_check
      _
    $region15: #{tpu_custom_call.1} parent=1 // pred_check_branch
      %39 = sbr.rel (0) target = $region17
    $region16: #{tpu_custom_call.1} parent=1 // pred_region
      _
    $region17: #{tpu_custom_call.1} parent=1 // pred_fallthru
      _
    // Predicated region
    $region18: #{tpu_custom_call.1} parent=1 // pred_check
      _
    $region19: #{tpu_custom_call.1} parent=1 // pred_check_branch
      %41 = sbr.rel (0) target = $region21
    $region20: #{tpu_custom_call.1} parent=1 // pred_region
      %43 = dma.done [#allocation3], 1024
    $region21: #{tpu_custom_call.1} parent=1 // pred_fallthru
      _
    // Predicated region
    $region22: #{tpu_custom_call.1} parent=1 // pred_check
      _
    $region23: #{tpu_custom_call.1} parent=1 // pred_check_branch
      %45 = sbr.rel (0) target = $region25
    $region24: #{tpu_custom_call.1} parent=1 // pred_region
      %47 = dma.done [#allocation6], 8192
    $region25: #{tpu_custom_call.1} parent=1 // pred_fallthru
      _
    %v48 = vld [vmem:[#allocation2] sm:$0xff]
    %v49 = vld [vmem:[#allocation2 + $0x8] sm:$0xff]
    %v50 = vld [vmem:[#allocation2 + $0x10] sm:$0xff]
    %v51 = vld [vmem:[#allocation2 + $0x18] sm:$0xff]
    %v52 = vld [vmem:[#allocation2 + $0x20] sm:$0xff]
    %v53 = vld [vmem:[#allocation2 + $0x28] sm:$0xff]
    %v54 = vld [vmem:[#allocation2 + $0x30] sm:$0xff]
    %v55 = vld [vmem:[#allocation2 + $0x38] sm:$0xff]
    %v56 = vpack.c.bf16 %v48, %v48
    %v57 = vpack.c.bf16 %v49, %v49
    %v58 = vpack.c.bf16 %v50, %v50
    %v59 = vpack.c.bf16 %v51, %v51
    %v60 = vpack.c.bf16 %v52, %v52
    %v61 = vpack.c.bf16 %v53, %v53
    %v62 = vpack.c.bf16 %v54, %v54
    %v63 = vpack.c.bf16 %v55, %v55
    %v64 = vld [vmem:[#allocation5] sm:$0xf]
    %v65 = vld [vmem:[#allocation5 + $0x4] sm:$0xf]
    %v66 = vld [vmem:[#allocation5 + $0x8] sm:$0xf]
    %v67 = vld [vmem:[#allocation5 + $0xc] sm:$0xf]
    %v68 = vld [vmem:[#allocation5 + $0x10] sm:$0xf]
    %v69 = vld [vmem:[#allocation5 + $0x14] sm:$0xf]
    %v70 = vld [vmem:[#allocation5 + $0x18] sm:$0xf]
    %v71 = vld [vmem:[#allocation5 + $0x1c] sm:$0xf]
    %v72 = vld [vmem:[#allocation5 + $0x20] sm:$0xf]
    %v73 = vld [vmem:[#allocation5 + $0x24] sm:$0xf]
    %v74 = vld [vmem:[#allocation5 + $0x28] sm:$0xf]
    %v75 = vld [vmem:[#allocation5 + $0x2c] sm:$0xf]
    %v76 = vld [vmem:[#allocation5 + $0x30] sm:$0xf]
    %v77 = vld [vmem:[#allocation5 + $0x34] sm:$0xf]
    %v78 = vld [vmem:[#allocation5 + $0x38] sm:$0xf]
    %v79 = vld [vmem:[#allocation5 + $0x3c] sm:$0xf]
    %v80 = vld [vmem:[#allocation5 + $0x40] sm:$0xf]
    %v81 = vld [vmem:[#allocation5 + $0x44] sm:$0xf]
    %v82 = vld [vmem:[#allocation5 + $0x48] sm:$0xf]
    %v83 = vld [vmem:[#allocation5 + $0x4c] sm:$0xf]
    %v84 = vld [vmem:[#allocation5 + $0x50] sm:$0xf]
    %v85 = vld [vmem:[#allocation5 + $0x54] sm:$0xf]
    %v86 = vld [vmem:[#allocation5 + $0x58] sm:$0xf]
    %v87 = vld [vmem:[#allocation5 + $0x5c] sm:$0xf]
    %v88 = vld [vmem:[#allocation5 + $0x60] sm:$0xf]
    %v89 = vld [vmem:[#allocation5 + $0x64] sm:$0xf]
    %v90 = vld [vmem:[#allocation5 + $0x68] sm:$0xf]
    %v91 = vld [vmem:[#allocation5 + $0x6c] sm:$0xf]
    %v92 = vld [vmem:[#allocation5 + $0x70] sm:$0xf]
    %v93 = vld [vmem:[#allocation5 + $0x74] sm:$0xf]
    %v94 = vld [vmem:[#allocation5 + $0x78] sm:$0xf]
    %v95 = vld [vmem:[#allocation5 + $0x7c] sm:$0xf]
    %v96 = vld [vmem:[#allocation5 + $0x80] sm:$0xf]
    %v97 = vld [vmem:[#allocation5 + $0x84] sm:$0xf]
    %v98 = vld [vmem:[#allocation5 + $0x88] sm:$0xf]
    %v99 = vld [vmem:[#allocation5 + $0x8c] sm:$0xf]
    %v100 = vld [vmem:[#allocation5 + $0x90] sm:$0xf]
    %v101 = vld [vmem:[#allocation5 + $0x94] sm:$0xf]
    %v102 = vld [vmem:[#allocation5 + $0x98] sm:$0xf]
    %v103 = vld [vmem:[#allocation5 + $0x9c] sm:$0xf]
    %v104 = vld [vmem:[#allocation5 + $0xa0] sm:$0xf]
    %v105 = vld [vmem:[#allocation5 + $0xa4] sm:$0xf]
    %v106 = vld [vmem:[#allocation5 + $0xa8] sm:$0xf]
    %v107 = vld [vmem:[#allocation5 + $0xac] sm:$0xf]
    %v108 = vld [vmem:[#allocation5 + $0xb0] sm:$0xf]
    %v109 = vld [vmem:[#allocation5 + $0xb4] sm:$0xf]
    %v110 = vld [vmem:[#allocation5 + $0xb8] sm:$0xf]
    %v111 = vld [vmem:[#allocation5 + $0xbc] sm:$0xf]
    %v112 = vld [vmem:[#allocation5 + $0xc0] sm:$0xf]
    %v113 = vld [vmem:[#allocation5 + $0xc4] sm:$0xf]
    %v114 = vld [vmem:[#allocation5 + $0xc8] sm:$0xf]
    %v115 = vld [vmem:[#allocation5 + $0xcc] sm:$0xf]
    %v116 = vld [vmem:[#allocation5 + $0xd0] sm:$0xf]
    %v117 = vld [vmem:[#allocation5 + $0xd4] sm:$0xf]
    %v118 = vld [vmem:[#allocation5 + $0xd8] sm:$0xf]
    %v119 = vld [vmem:[#allocation5 + $0xdc] sm:$0xf]
    %v120 = vld [vmem:[#allocation5 + $0xe0] sm:$0xf]
    %v121 = vld [vmem:[#allocation5 + $0xe4] sm:$0xf]
    %v122 = vld [vmem:[#allocation5 + $0xe8] sm:$0xf]
    %v123 = vld [vmem:[#allocation5 + $0xec] sm:$0xf]
    %v124 = vld [vmem:[#allocation5 + $0xf0] sm:$0xf]
    %v125 = vld [vmem:[#allocation5 + $0xf4] sm:$0xf]
    %v126 = vld [vmem:[#allocation5 + $0xf8] sm:$0xf]
    %v127 = vld [vmem:[#allocation5 + $0xfc] sm:$0xf]
    %v128 = vld [vmem:[#allocation5 + $0x100] sm:$0xf]
    %v129 = vld [vmem:[#allocation5 + $0x104] sm:$0xf]
    %v130 = vld [vmem:[#allocation5 + $0x108] sm:$0xf]
    %v131 = vld [vmem:[#allocation5 + $0x10c] sm:$0xf]
    %v132 = vld [vmem:[#allocation5 + $0x110] sm:$0xf]
    %v133 = vld [vmem:[#allocation5 + $0x114] sm:$0xf]
    %v134 = vld [vmem:[#allocation5 + $0x118] sm:$0xf]
    %v135 = vld [vmem:[#allocation5 + $0x11c] sm:$0xf]
    %v136 = vld [vmem:[#allocation5 + $0x120] sm:$0xf]
    %v137 = vld [vmem:[#allocation5 + $0x124] sm:$0xf]
    %v138 = vld [vmem:[#allocation5 + $0x128] sm:$0xf]
    %v139 = vld [vmem:[#allocation5 + $0x12c] sm:$0xf]
    %v140 = vld [vmem:[#allocation5 + $0x130] sm:$0xf]
    %v141 = vld [vmem:[#allocation5 + $0x134] sm:$0xf]
    %v142 = vld [vmem:[#allocation5 + $0x138] sm:$0xf]
    %v143 = vld [vmem:[#allocation5 + $0x13c] sm:$0xf]
    %v144 = vld [vmem:[#allocation5 + $0x140] sm:$0xf]
    %v145 = vld [vmem:[#allocation5 + $0x144] sm:$0xf]
    %v146 = vld [vmem:[#allocation5 + $0x148] sm:$0xf]
    %v147 = vld [vmem:[#allocation5 + $0x14c] sm:$0xf]
    %v148 = vld [vmem:[#allocation5 + $0x150] sm:$0xf]
    %v149 = vld [vmem:[#allocation5 + $0x154] sm:$0xf]
    %v150 = vld [vmem:[#allocation5 + $0x158] sm:$0xf]
    %v151 = vld [vmem:[#allocation5 + $0x15c] sm:$0xf]
    %v152 = vld [vmem:[#allocation5 + $0x160] sm:$0xf]
    %v153 = vld [vmem:[#allocation5 + $0x164] sm:$0xf]
    %v154 = vld [vmem:[#allocation5 + $0x168] sm:$0xf]
    %v155 = vld [vmem:[#allocation5 + $0x16c] sm:$0xf]
    %v156 = vld [vmem:[#allocation5 + $0x170] sm:$0xf]
    %v157 = vld [vmem:[#allocation5 + $0x174] sm:$0xf]
    %v158 = vld [vmem:[#allocation5 + $0x178] sm:$0xf]
    %v159 = vld [vmem:[#allocation5 + $0x17c] sm:$0xf]
    %v160 = vld [vmem:[#allocation5 + $0x180] sm:$0xf]
    %v161 = vld [vmem:[#allocation5 + $0x184] sm:$0xf]
    %v162 = vld [vmem:[#allocation5 + $0x188] sm:$0xf]
    %v163 = vld [vmem:[#allocation5 + $0x18c] sm:$0xf]
    %v164 = vld [vmem:[#allocation5 + $0x190] sm:$0xf]
    %v165 = vld [vmem:[#allocation5 + $0x194] sm:$0xf]
    %v166 = vld [vmem:[#allocation5 + $0x198] sm:$0xf]
    %v167 = vld [vmem:[#allocation5 + $0x19c] sm:$0xf]
    %v168 = vld [vmem:[#allocation5 + $0x1a0] sm:$0xf]
    %v169 = vld [vmem:[#allocation5 + $0x1a4] sm:$0xf]
    %v170 = vld [vmem:[#allocation5 + $0x1a8] sm:$0xf]
    %v171 = vld [vmem:[#allocation5 + $0x1ac] sm:$0xf]
    %v172 = vld [vmem:[#allocation5 + $0x1b0] sm:$0xf]
    %v173 = vld [vmem:[#allocation5 + $0x1b4] sm:$0xf]
    %v174 = vld [vmem:[#allocation5 + $0x1b8] sm:$0xf]
    %v175 = vld [vmem:[#allocation5 + $0x1bc] sm:$0xf]
    %v176 = vld [vmem:[#allocation5 + $0x1c0] sm:$0xf]
    %v177 = vld [vmem:[#allocation5 + $0x1c4] sm:$0xf]
    %v178 = vld [vmem:[#allocation5 + $0x1c8] sm:$0xf]
    %v179 = vld [vmem:[#allocation5 + $0x1cc] sm:$0xf]
    %v180 = vld [vmem:[#allocation5 + $0x1d0] sm:$0xf]
    %v181 = vld [vmem:[#allocation5 + $0x1d4] sm:$0xf]
    %v182 = vld [vmem:[#allocation5 + $0x1d8] sm:$0xf]
    %v183 = vld [vmem:[#allocation5 + $0x1dc] sm:$0xf]
    %v184 = vld [vmem:[#allocation5 + $0x1e0] sm:$0xf]
    %v185 = vld [vmem:[#allocation5 + $0x1e4] sm:$0xf]
    %v186 = vld [vmem:[#allocation5 + $0x1e8] sm:$0xf]
    %v187 = vld [vmem:[#allocation5 + $0x1ec] sm:$0xf]
    %v188 = vld [vmem:[#allocation5 + $0x1f0] sm:$0xf]
    %v189 = vld [vmem:[#allocation5 + $0x1f4] sm:$0xf]
    %v190 = vld [vmem:[#allocation5 + $0x1f8] sm:$0xf]
    %v191 = vld [vmem:[#allocation5 + $0x1fc] sm:$0xf]
    %v192 = vld [vmem:[%s2] sm:$0x1]
    %v194 = vperm.slane %v192, 0
    %v324 = vunpack.c.l.b16 %v64
    %v325 = vunpack.c.l.b16 %v65
    %v326 = vunpack.c.l.b16 %v66
    %v327 = vunpack.c.l.b16 %v67
    %v328 = vunpack.c.l.b16 %v68
    %v329 = vunpack.c.l.b16 %v69
    %v330 = vunpack.c.l.b16 %v70
    %v331 = vunpack.c.l.b16 %v71
    %v332 = vunpack.c.l.b16 %v72
    %v333 = vunpack.c.l.b16 %v73
    %v334 = vunpack.c.l.b16 %v74
    %v335 = vunpack.c.l.b16 %v75
    %v336 = vunpack.c.l.b16 %v76
    %v337 = vunpack.c.l.b16 %v77
    %v338 = vunpack.c.l.b16 %v78
    %v339 = vunpack.c.l.b16 %v79
    %v340 = vunpack.c.l.b16 %v80
    %v341 = vunpack.c.l.b16 %v81
    %v342 = vunpack.c.l.b16 %v82
    %v343 = vunpack.c.l.b16 %v83
    %v344 = vunpack.c.l.b16 %v84
    %v345 = vunpack.c.l.b16 %v85
    %v346 = vunpack.c.l.b16 %v86
    %v347 = vunpack.c.l.b16 %v87
    %v348 = vunpack.c.l.b16 %v88
    %v349 = vunpack.c.l.b16 %v89
    %v350 = vunpack.c.l.b16 %v90
    %v351 = vunpack.c.l.b16 %v91
    %v352 = vunpack.c.l.b16 %v92
    %v353 = vunpack.c.l.b16 %v93
    %v354 = vunpack.c.l.b16 %v94
    %v355 = vunpack.c.l.b16 %v95
    %v356 = vunpack.c.l.b16 %v96
    %v357 = vunpack.c.l.b16 %v97
    %v358 = vunpack.c.l.b16 %v98
    %v359 = vunpack.c.l.b16 %v99
    %v360 = vunpack.c.l.b16 %v100
    %v361 = vunpack.c.l.b16 %v101
    %v362 = vunpack.c.l.b16 %v102
    %v363 = vunpack.c.l.b16 %v103
    %v364 = vunpack.c.l.b16 %v104
    %v365 = vunpack.c.l.b16 %v105
    %v366 = vunpack.c.l.b16 %v106
    %v367 = vunpack.c.l.b16 %v107
    %v368 = vunpack.c.l.b16 %v108
    %v369 = vunpack.c.l.b16 %v109
    %v370 = vunpack.c.l.b16 %v110
    %v371 = vunpack.c.l.b16 %v111
    %v372 = vunpack.c.l.b16 %v112
    %v373 = vunpack.c.l.b16 %v113
    %v374 = vunpack.c.l.b16 %v114
    %v375 = vunpack.c.l.b16 %v115
    %v376 = vunpack.c.l.b16 %v116
    %v377 = vunpack.c.l.b16 %v117
    %v378 = vunpack.c.l.b16 %v118
    %v379 = vunpack.c.l.b16 %v119
    %v380 = vunpack.c.l.b16 %v120
    %v381 = vunpack.c.l.b16 %v121
    %v382 = vunpack.c.l.b16 %v122
    %v383 = vunpack.c.l.b16 %v123
    %v384 = vunpack.c.l.b16 %v124
    %v385 = vunpack.c.l.b16 %v125
    %v386 = vunpack.c.l.b16 %v126
    %v387 = vunpack.c.l.b16 %v127
    %v388 = vunpack.c.l.b16 %v128
    %v389 = vunpack.c.l.b16 %v129
    %v390 = vunpack.c.l.b16 %v130
    %v391 = vunpack.c.l.b16 %v131
    %v392 = vunpack.c.l.b16 %v132
    %v393 = vunpack.c.l.b16 %v133
    %v394 = vunpack.c.l.b16 %v134
    %v395 = vunpack.c.l.b16 %v135
    %v396 = vunpack.c.l.b16 %v136
    %v397 = vunpack.c.l.b16 %v137
    %v398 = vunpack.c.l.b16 %v138
    %v399 = vunpack.c.l.b16 %v139
    %v400 = vunpack.c.l.b16 %v140
    %v401 = vunpack.c.l.b16 %v141
    %v402 = vunpack.c.l.b16 %v142
    %v403 = vunpack.c.l.b16 %v143
    %v404 = vunpack.c.l.b16 %v144
    %v405 = vunpack.c.l.b16 %v145
    %v406 = vunpack.c.l.b16 %v146
    %v407 = vunpack.c.l.b16 %v147
    %v408 = vunpack.c.l.b16 %v148
    %v409 = vunpack.c.l.b16 %v149
    %v410 = vunpack.c.l.b16 %v150
    %v411 = vunpack.c.l.b16 %v151
    %v412 = vunpack.c.l.b16 %v152
    %v413 = vunpack.c.l.b16 %v153
    %v414 = vunpack.c.l.b16 %v154
    %v415 = vunpack.c.l.b16 %v155
    %v416 = vunpack.c.l.b16 %v156
    %v417 = vunpack.c.l.b16 %v157
    %v418 = vunpack.c.l.b16 %v158
    %v419 = vunpack.c.l.b16 %v159
    %v420 = vunpack.c.l.b16 %v160
    %v421 = vunpack.c.l.b16 %v161
    %v422 = vunpack.c.l.b16 %v162
    %v423 = vunpack.c.l.b16 %v163
    %v424 = vunpack.c.l.b16 %v164
    %v425 = vunpack.c.l.b16 %v165
    %v426 = vunpack.c.l.b16 %v166
    %v427 = vunpack.c.l.b16 %v167
    %v428 = vunpack.c.l.b16 %v168
    %v429 = vunpack.c.l.b16 %v169
    %v430 = vunpack.c.l.b16 %v170
    %v431 = vunpack.c.l.b16 %v171
    %v432 = vunpack.c.l.b16 %v172
    %v433 = vunpack.c.l.b16 %v173
    %v434 = vunpack.c.l.b16 %v174
    %v435 = vunpack.c.l.b16 %v175
    %v436 = vunpack.c.l.b16 %v176
    %v437 = vunpack.c.l.b16 %v177
    %v438 = vunpack.c.l.b16 %v178
    %v439 = vunpack.c.l.b16 %v179
    %v440 = vunpack.c.l.b16 %v180
    %v441 = vunpack.c.l.b16 %v181
    %v442 = vunpack.c.l.b16 %v182
    %v443 = vunpack.c.l.b16 %v183
    %v444 = vunpack.c.l.b16 %v184
    %v445 = vunpack.c.l.b16 %v185
    %v446 = vunpack.c.l.b16 %v186
    %v447 = vunpack.c.l.b16 %v187
    %v448 = vunpack.c.l.b16 %v188
    %v449 = vunpack.c.l.b16 %v189
    %v450 = vunpack.c.l.b16 %v190
    %v451 = vunpack.c.l.b16 %v191
    %v452 = vpack.c.b16 %v325, %v324
    %v453 = vpack.c.b16 %v327, %v326
    %v454 = vpack.c.b16 %v329, %v328
    %v455 = vpack.c.b16 %v331, %v330
    %v456 = vpack.c.b16 %v333, %v332
    %v457 = vpack.c.b16 %v335, %v334
    %v458 = vpack.c.b16 %v337, %v336
    %v459 = vpack.c.b16 %v339, %v338
    %v460 = vpack.c.b16 %v341, %v340
    %v461 = vpack.c.b16 %v343, %v342
    %v462 = vpack.c.b16 %v345, %v344
    %v463 = vpack.c.b16 %v347, %v346
    %v464 = vpack.c.b16 %v349, %v348
    %v465 = vpack.c.b16 %v351, %v350
    %v466 = vpack.c.b16 %v353, %v352
    %v467 = vpack.c.b16 %v355, %v354
    %v468 = vpack.c.b16 %v357, %v356
    %v469 = vpack.c.b16 %v359, %v358
    %v470 = vpack.c.b16 %v361, %v360
    %v471 = vpack.c.b16 %v363, %v362
    %v472 = vpack.c.b16 %v365, %v364
    %v473 = vpack.c.b16 %v367, %v366
    %v474 = vpack.c.b16 %v369, %v368
    %v475 = vpack.c.b16 %v371, %v370
    %v476 = vpack.c.b16 %v373, %v372
    %v477 = vpack.c.b16 %v375, %v374
    %v478 = vpack.c.b16 %v377, %v376
    %v479 = vpack.c.b16 %v379, %v378
    %v480 = vpack.c.b16 %v381, %v380
    %v481 = vpack.c.b16 %v383, %v382
    %v482 = vpack.c.b16 %v385, %v384
    %v483 = vpack.c.b16 %v387, %v386
    %v484 = vpack.c.b16 %v389, %v388
    %v485 = vpack.c.b16 %v391, %v390
    %v486 = vpack.c.b16 %v393, %v392
    %v487 = vpack.c.b16 %v395, %v394
    %v488 = vpack.c.b16 %v397, %v396
    %v489 = vpack.c.b16 %v399, %v398
    %v490 = vpack.c.b16 %v401, %v400
    %v491 = vpack.c.b16 %v403, %v402
    %v492 = vpack.c.b16 %v405, %v404
    %v493 = vpack.c.b16 %v407, %v406
    %v494 = vpack.c.b16 %v409, %v408
    %v495 = vpack.c.b16 %v411, %v410
    %v496 = vpack.c.b16 %v413, %v412
    %v497 = vpack.c.b16 %v415, %v414
    %v498 = vpack.c.b16 %v417, %v416
    %v499 = vpack.c.b16 %v419, %v418
    %v500 = vpack.c.b16 %v421, %v420
    %v501 = vpack.c.b16 %v423, %v422
    %v502 = vpack.c.b16 %v425, %v424
    %v503 = vpack.c.b16 %v427, %v426
    %v504 = vpack.c.b16 %v429, %v428
    %v505 = vpack.c.b16 %v431, %v430
    %v506 = vpack.c.b16 %v433, %v432
    %v507 = vpack.c.b16 %v435, %v434
    %v508 = vpack.c.b16 %v437, %v436
    %v509 = vpack.c.b16 %v439, %v438
    %v510 = vpack.c.b16 %v441, %v440
    %v511 = vpack.c.b16 %v443, %v442
    %v512 = vpack.c.b16 %v445, %v444
    %v513 = vpack.c.b16 %v447, %v446
    %v514 = vpack.c.b16 %v449, %v448
    %v515 = vpack.c.b16 %v451, %v450
    %580 = vmatpush.bf16.msra.mxu0 %v459
    %581 = vmatpush.bf16.msra.mxu0 %v458
    %582 = vmatpush.bf16.msra.mxu0 %v457
    %583 = vmatpush.bf16.msra.mxu0 %v456
    %584 = vmatpush.bf16.msra.mxu0 %v455
    %585 = vmatpush.bf16.msra.mxu0 %v454
    %586 = vmatpush.bf16.msra.mxu0 %v453
    %587 = vmatpush.bf16.msra.mxu0 %v452
    %588 = vmatmul.bf16.gmra.mxu0 %v56
    %v589 = vpop.f32.mrf.mxu0
    %v590 = vadd.f32 %v194, %v589
    %v591 = vpop.f32.mrf.mxu0
    %592 = vdwg.mxu0
    %593 = vmatpush.bf16.msra.mxu0 %v467
    %594 = vmatpush.bf16.msra.mxu0 %v466
    %595 = vmatpush.bf16.msra.mxu0 %v465
    %596 = vmatpush.bf16.msra.mxu0 %v464
    %597 = vmatpush.bf16.msra.mxu0 %v463
    %598 = vmatpush.bf16.msra.mxu0 %v462
    %599 = vmatpush.bf16.msra.mxu0 %v461
    %600 = vmatpush.bf16.msra.mxu0 %v460
    %601 = vmatmul.bf16.gmra.mxu0 %v57
    %v602 = vpop.f32.mrf.mxu0
    %v603 = vadd.f32 %v590, %v602
    %v604 = vpop.f32.mrf.mxu0
    %605 = vdwg.mxu0
    %606 = vmatpush.bf16.msra.mxu0 %v475
    %607 = vmatpush.bf16.msra.mxu0 %v474
    %608 = vmatpush.bf16.msra.mxu0 %v473
    %609 = vmatpush.bf16.msra.mxu0 %v472
    %610 = vmatpush.bf16.msra.mxu0 %v471
    %611 = vmatpush.bf16.msra.mxu0 %v470
    %612 = vmatpush.bf16.msra.mxu0 %v469
    %613 = vmatpush.bf16.msra.mxu0 %v468
    %614 = vmatmul.bf16.gmra.mxu0 %v58
    %v615 = vpop.f32.mrf.mxu0
    %v616 = vadd.f32 %v603, %v615
    %v617 = vpop.f32.mrf.mxu0
    %618 = vdwg.mxu0
    %619 = vmatpush.bf16.msra.mxu0 %v483
    %620 = vmatpush.bf16.msra.mxu0 %v482
    %621 = vmatpush.bf16.msra.mxu0 %v481
    %622 = vmatpush.bf16.msra.mxu0 %v480
    %623 = vmatpush.bf16.msra.mxu0 %v479
    %624 = vmatpush.bf16.msra.mxu0 %v478
    %625 = vmatpush.bf16.msra.mxu0 %v477
    %626 = vmatpush.bf16.msra.mxu0 %v476
    %627 = vmatmul.bf16.gmra.mxu0 %v59
    %v628 = vpop.f32.mrf.mxu0
    %v629 = vadd.f32 %v616, %v628
    %v630 = vpop.f32.mrf.mxu0
    %631 = vdwg.mxu0
    %632 = vmatpush.bf16.msra.mxu0 %v491
    %633 = vmatpush.bf16.msra.mxu0 %v490
    %634 = vmatpush.bf16.msra.mxu0 %v489
    %635 = vmatpush.bf16.msra.mxu0 %v488
    %636 = vmatpush.bf16.msra.mxu0 %v487
    %637 = vmatpush.bf16.msra.mxu0 %v486
    %638 = vmatpush.bf16.msra.mxu0 %v485
    %639 = vmatpush.bf16.msra.mxu0 %v484
    %640 = vmatmul.bf16.gmra.mxu0 %v60
    %v641 = vpop.f32.mrf.mxu0
    %v642 = vadd.f32 %v629, %v641
    %v643 = vpop.f32.mrf.mxu0
    %644 = vdwg.mxu0
    %645 = vmatpush.bf16.msra.mxu0 %v499
    %646 = vmatpush.bf16.msra.mxu0 %v498
    %647 = vmatpush.bf16.msra.mxu0 %v497
    %648 = vmatpush.bf16.msra.mxu0 %v496
    %649 = vmatpush.bf16.msra.mxu0 %v495
    %650 = vmatpush.bf16.msra.mxu0 %v494
    %651 = vmatpush.bf16.msra.mxu0 %v493
    %652 = vmatpush.bf16.msra.mxu0 %v492
    %653 = vmatmul.bf16.gmra.mxu0 %v61
    %v654 = vpop.f32.mrf.mxu0
    %v655 = vadd.f32 %v642, %v654
    %v656 = vpop.f32.mrf.mxu0
    %657 = vdwg.mxu0
    %658 = vmatpush.bf16.msra.mxu0 %v507
    %659 = vmatpush.bf16.msra.mxu0 %v506
    %660 = vmatpush.bf16.msra.mxu0 %v505
    %661 = vmatpush.bf16.msra.mxu0 %v504
    %662 = vmatpush.bf16.msra.mxu0 %v503
    %663 = vmatpush.bf16.msra.mxu0 %v502
    %664 = vmatpush.bf16.msra.mxu0 %v501
    %665 = vmatpush.bf16.msra.mxu0 %v500
    %666 = vmatmul.bf16.gmra.mxu0 %v62
    %v667 = vpop.f32.mrf.mxu0
    %v668 = vadd.f32 %v655, %v667
    %v669 = vpop.f32.mrf.mxu0
    %670 = vdwg.mxu0
    %671 = vmatpush.bf16.msra.mxu0 %v515
    %672 = vmatpush.bf16.msra.mxu0 %v514
    %673 = vmatpush.bf16.msra.mxu0 %v513
    %674 = vmatpush.bf16.msra.mxu0 %v512
    %675 = vmatpush.bf16.msra.mxu0 %v511
    %676 = vmatpush.bf16.msra.mxu0 %v510
    %677 = vmatpush.bf16.msra.mxu0 %v509
    %678 = vmatpush.bf16.msra.mxu0 %v508
    %679 = vmatmul.bf16.gmra.mxu0 %v63
    %v680 = vpop.f32.mrf.mxu0
    %v681 = vadd.f32 %v668, %v680
    %v682 = vpop.f32.mrf.mxu0
    %683 = vdwg.mxu0
    %v684 = vld [vmem:[%s3] sm:$0x1]
    %v685 = vlaneseq
    %v686 = vand.u32 %v685, 127
    %687 = vmax.xlane.f32.xlu0 %v681
    %v688 = vpop.xlane.xlu0 %687
    %vm689 = vcmp.eq.f32.partialorder %v681, %v688
    %v690 = vsel %vm689, %v686, 128
    %v691 = vand.u32 %v690, 65535
    %v692 = vshra.s32 %v690, 16
    %v693 = vcvt.s32.f32 %v691
    %v694 = vcvt.s32.f32 %v692
    %695 = vmin.xlane.f32.xlu0 %v694
    %v696 = vpop.xlane.xlu0 %695
    %vm697 = vcmp.eq.f32.partialorder %v694, %v696
    %v698 = vsel %vm697, %v693, inf
    %699 = vmin.xlane.f32.xlu0 %v698
    %v700 = vpop.xlane.xlu0 %699
    %v701 = vcvt.f32.s32 %v700
    %v702 = vcvt.f32.s32 %v696
    %v703 = vshll.u32 %v702, 16
    %v704 = vadd.s32 %v703, %v701
    %vm705 = vcmp.eq.s32.totalorder %v686, %v704
    %v706 = vperm.slane %v684, 0
    %v707 = vsel %vm705, %v706, 0
    %v708 = vand.u32 %v707, 65535
    %v709 = vshrl.u32 %v707, 16
    %v710 = vcvt.s32.f32 %v708
    %v711 = vcvt.s32.f32 %v709
    %712 = vadd.xlane.f32.xlu0 %v710
    %v713 = vpop.xlane.xlu0 %712
    %714 = vadd.xlane.f32.xlu0 %v711
    %v715 = vpop.xlane.xlu0 %714
    %v716 = vcvt.f32.s32 %v713
    %v717 = vcvt.f32.s32 %v715
    %v718 = vshll.u32 %v717, 16
    %v719 = vadd.s32 %v718, %v716
    %v720 = vperm.slane %v719, %v686
    %vm721 = vcmask 57344
    %722 = vst.msk [vmem:[#allocation7] sm:$0x1] %vm721, %v720
    // Predicated region
    $region26: #{tpu_custom_call.1} parent=1 // pred_check
      _
    $region27: #{tpu_custom_call.1} parent=1 // pred_check_branch
      %724 = sbr.rel (0) target = $region29
    $region28: #{tpu_custom_call.1} parent=1 // pred_region
      %726 = vsyncadd [#allocation4], 0
      %s728 = sshll.u32 [#allocation7], 4
      %s729 = int_to_ptr.vmem [resolvable:$true] %s728
      %s730 = sshll.u32 %s4, 4
      %s731 = int_to_ptr.hbm [resolvable:$true] %s730
      %733 = dma.vmem_to_hbm [thread:$0]  %s729, 16, %s731, [#allocation4]
    $region29: #{tpu_custom_call.1} parent=1 // pred_fallthru
      _
    // Predicated region
    $region30: #{tpu_custom_call.1} parent=1 // pred_check
      _
    $region31: #{tpu_custom_call.1} parent=1 // pred_check_branch
      %735 = sbr.rel (0) target = $region33
    $region32: #{tpu_custom_call.1} parent=1 // pred_region
      %737 = dma.done [#allocation4], 16
    $region33: #{tpu_custom_call.1} parent=1 // pred_fallthru
      _
    %738 = vsyncpa [#allocation3], 1
    %739 = vsyncpa [#allocation6], 1
    %740 = vsyncpa [#allocation4], 1

</llo_original>
